<compile_context>
chip_gen: v5e
topology: v5e:2x2
jax: 0.10.0
libtpu: 0.0.40
codegen_flags: <defaults>
</compile_context>

<pallas_src>
import functools

import jax
import jax.numpy as jnp
from jax.experimental import pallas as pl
from jax.experimental.pallas import tpu as pltpu

_LANES = 128
_SUBLANES = 8


def _make_angular_loss_kernel(inv_b):
    """inv_b = 1 / true_batch_size, baked in as a compile-time constant."""

    def kernel(pred_ref, targ_ref, out_ref, acc_ref):
        step = pl.program_id(0)

        @pl.when(step == 0)
        def _init():
            acc_ref[...] = jnp.zeros_like(acc_ref)

        # (block_rows, 128) tiles; lanes hold interleaved (y, x) pairs.
        p = pred_ref[...].astype(jnp.float32)
        t = targ_ref[...].astype(jnp.float32)

        pt = p * t
        pp = p * p
        tt = t * t

        # roll(shift=1) brings lane j-1 into lane j (jnp.roll semantics), so at
        # odd lanes (which hold the x component of a pair) we get the full pair
        # sums y*y' + x*x', y^2 + x^2, ... .  Even lanes hold garbage pairings
        # and are masked out below.
        dot = pt + pltpu.roll(pt, shift=1, axis=1)
        pn2 = pp + pltpu.roll(pp, shift=1, axis=1)
        tn2 = tt + pltpu.roll(tt, shift=1, axis=1)

        inv_pn = jax.lax.rsqrt(jnp.where(pn2 > 0.0, pn2, 1.0))
        inv_tn = jax.lax.rsqrt(jnp.where(tn2 > 0.0, tn2, 1.0))

        # atan2(0, 0) == 0 semantics: a zero-magnitude vector acts as angle 0,
        # i.e. direction (0, 1).  At odd lanes `p` / `t` already hold x_p / x_t.
        cos_d = jnp.where(
            pn2 > 0.0,
            jnp.where(tn2 > 0.0, dot * inv_pn * inv_tn, p * inv_pn),
            jnp.where(tn2 > 0.0, t * inv_tn, 1.0),
        )

        lane = jax.lax.broadcasted_iota(jnp.int32, p.shape, 1)
        loss = jnp.where((lane & 1) == 1, 1.0 - cos_d, 0.0)

        # Sublane-axis reduction (XLU, otherwise idle) -> per-lane partial sums.
        acc_ref[...] += jnp.sum(loss, axis=0, keepdims=True)

        @pl.when(step == pl.num_programs(0) - 1)
        def _finalize():
            out_ref[0, 0] = jnp.sum(acc_ref[...]) * inv_b

    return kernel


def _to_lane_dense(x, total_rows):
    """Flatten [B, 2] row-major (y0,x0,y1,x1,...), zero-pad, reshape to (rows, 128)."""
    n = x.size
    n_pad = total_rows * _LANES
    flat = x.reshape(-1)
    if n_pad != n:
        flat = jnp.pad(flat, (0, n_pad - n))
    return flat.reshape(total_rows, _LANES)


@functools.partial(jax.jit, static_argnames=("max_block_rows",))
def angular_loss(predictions, targets, *, max_block_rows=2048):
    """predictions, targets: [B, 2] arrays. Returns scalar float32 loss."""
    if predictions.shape != targets.shape:
        raise ValueError("predictions and targets must have the same shape")
    if predictions.ndim != 2 or predictions.shape[1] != 2:
        raise ValueError("expected [B, 2] inputs")

    b = predictions.shape[0]
    n = 2 * b

    rows = pl.cdiv(n, _LANES)
    rows = pl.cdiv(rows, _SUBLANES) * _SUBLANES          # sublane-align
    block_rows = min(int(max_block_rows), rows)          # multiple of 8
    num_blocks = pl.cdiv(rows, block_rows)
    total_rows = num_blocks * block_rows

    p2d = _to_lane_dense(predictions, total_rows)
    t2d = _to_lane_dense(targets, total_rows)

    tile_spec = pl.BlockSpec((block_rows, _LANES), lambda i: (i, 0))

    out = pl.pallas_call(
        _make_angular_loss_kernel(1.0 / b),
        out_shape=jax.ShapeDtypeStruct((1, 1), jnp.float32),
        grid_spec=pltpu.PrefetchScalarGridSpec(
            num_scalar_prefetch=0,
            grid=(num_blocks,),
            in_specs=[tile_spec, tile_spec],
            out_specs=pl.BlockSpec(
                (1, 1), lambda i: (0, 0), memory_space=pltpu.MemorySpace.SMEM
            ),
            scratch_shapes=[pltpu.VMEM((1, _LANES), jnp.float32)],
        ),
        compiler_params=pltpu.CompilerParams(
            dimension_semantics=("arbitrary",),  # reduction axis (accumulator)
        ),
    )(p2d, t2d)
    return out[0, 0]


def _reference(predictions, targets):
    pred_angles = jnp.arctan2(predictions[:, 0], predictions[:, 1])
    true_angles = jnp.arctan2(targets[:, 0], targets[:, 1])
    return jnp.mean(1.0 - jnp.cos(pred_angles - true_angles))


if __name__ == "__main__":
    key = jax.random.PRNGKey(0)
    k1, k2 = jax.random.split(key)
    B = 8
    predictions = jax.random.normal(k1, (B, 2), dtype=jnp.float32)
    targets = jax.random.normal(k2, (B, 2), dtype=jnp.float32)
    # Exercise the atan2(0, 0) == 0 edge case (zero-magnitude prediction row).
    predictions = predictions.at[3].set(0.0)

    result = jax.block_until_ready(angular_loss(predictions, targets))
    ref = _reference(predictions, targets)
    assert jnp.allclose(result, ref, atol=1e-5, rtol=1e-5), (result, ref)

    print("KERNEL_OK")
</pallas_src>

<mosaic_0001>
module attributes {stable_mosaic.version = 11 : i64} {
  func.func @kernel(%arg0: i32, %arg1: memref<8x128xf32, #tpu.memory_space<vmem>>, %arg2: memref<8x128xf32, #tpu.memory_space<vmem>>, %arg3: memref<1x1xf32, #tpu.memory_space<smem>>, %arg4: memref<1x128xf32, #tpu.memory_space<vmem>>) attributes {dimension_semantics = [#tpu.dimension_semantics<arbitrary>], iteration_bounds = array<i64: 1>, scalar_prefetch = 0 : i64, scratch_operands = 1 : i64, tpu.core_type = #tpu.core_type<tc>, window_params = [{transform_indices = @transform_0, window_bounds = array<i64: 8, 128>}, {transform_indices = @transform_1, window_bounds = array<i64: 8, 128>}, {transform_indices = @transform_2, window_bounds = array<i64: 1, 1>}]} {
    %c0_i32 = arith.constant 0 : i32
    %0 = arith.cmpi eq, %arg0, %c0_i32 : i32
    %1 = arith.extui %0 : i1 to i32
    %c0_i32_0 = arith.constant 0 : i32
    %2 = arith.cmpi ne, %1, %c0_i32_0 : i32
    scf.if %2 {
      %cst_24 = arith.constant 0.000000e+00 : f32
      %55 = vector.broadcast %cst_24 : f32 to vector<1x128xf32>
      %c0_25 = arith.constant 0 : index
      %c0_26 = arith.constant 0 : index
      %56 = vector.load %arg4[%c0_25, %c0_26] : memref<1x128xf32, #tpu.memory_space<vmem>>, vector<1x128xf32>
      tpu.vector_store %arg4[%c0_25, %c0_26], %55 {strides = array<i32>} : memref<1x128xf32, #tpu.memory_space<vmem>>, vector<1x128xf32>,
    } else {
    }
    %c0 = arith.constant 0 : index
    %c0_1 = arith.constant 0 : index
    %3 = vector.load %arg1[%c0, %c0_1] : memref<8x128xf32, #tpu.memory_space<vmem>>, vector<8x128xf32>
    %c0_2 = arith.constant 0 : index
    %c0_3 = arith.constant 0 : index
    %4 = vector.load %arg2[%c0_2, %c0_3] : memref<8x128xf32, #tpu.memory_space<vmem>>, vector<8x128xf32>
    %5 = arith.mulf %3, %4 : vector<8x128xf32>
    %6 = arith.mulf %3, %3 : vector<8x128xf32>
    %7 = arith.mulf %4, %4 : vector<8x128xf32>
    %c1_i32 = arith.constant 1 : i32
    %8 = tpu.dynamic_rotate %5 by %c1_i32 dim 1 : vector<8x128xf32>, i32 -> vector<8x128xf32>
    %9 = arith.addf %5, %8 : vector<8x128xf32>
    %c1_i32_4 = arith.constant 1 : i32
    %10 = tpu.dynamic_rotate %6 by %c1_i32_4 dim 1 : vector<8x128xf32>, i32 -> vector<8x128xf32>
    %11 = arith.addf %6, %10 : vector<8x128xf32>
    %c1_i32_5 = arith.constant 1 : i32
    %12 = tpu.dynamic_rotate %7 by %c1_i32_5 dim 1 : vector<8x128xf32>, i32 -> vector<8x128xf32>
    %13 = arith.addf %7, %12 : vector<8x128xf32>
    %cst = arith.constant 0.000000e+00 : f32
    %14 = vector.broadcast %cst : f32 to vector<8x128xf32>
    %15 = arith.cmpf ogt, %11, %14 : vector<8x128xf32>
    %cst_6 = arith.constant 1.000000e+00 : f32
    %16 = vector.broadcast %cst_6 : f32 to vector<8x128xf32>
    %17 = arith.select %15, %11, %16 : vector<8x128xi1>, vector<8x128xf32>
    %18 = math.rsqrt %17 : vector<8x128xf32>
    %cst_7 = arith.constant 0.000000e+00 : f32
    %19 = vector.broadcast %cst_7 : f32 to vector<8x128xf32>
    %20 = arith.cmpf ogt, %13, %19 : vector<8x128xf32>
    %cst_8 = arith.constant 1.000000e+00 : f32
    %21 = vector.broadcast %cst_8 : f32 to vector<8x128xf32>
    %22 = arith.select %20, %13, %21 : vector<8x128xi1>, vector<8x128xf32>
    %23 = math.rsqrt %22 : vector<8x128xf32>
    %cst_9 = arith.constant 0.000000e+00 : f32
    %24 = vector.broadcast %cst_9 : f32 to vector<8x128xf32>
    %25 = arith.cmpf ogt, %11, %24 : vector<8x128xf32>
    %cst_10 = arith.constant 0.000000e+00 : f32
    %26 = vector.broadcast %cst_10 : f32 to vector<8x128xf32>
    %27 = arith.cmpf ogt, %13, %26 : vector<8x128xf32>
    %28 = arith.mulf %9, %18 : vector<8x128xf32>
    %29 = arith.mulf %28, %23 : vector<8x128xf32>
    %30 = arith.mulf %3, %18 : vector<8x128xf32>
    %31 = arith.select %27, %29, %30 : vector<8x128xi1>, vector<8x128xf32>
    %cst_11 = arith.constant 0.000000e+00 : f32
    %32 = vector.broadcast %cst_11 : f32 to vector<8x128xf32>
    %33 = arith.cmpf ogt, %13, %32 : vector<8x128xf32>
    %34 = arith.mulf %4, %23 : vector<8x128xf32>
    %cst_12 = arith.constant 1.000000e+00 : f32
    %35 = vector.broadcast %cst_12 : f32 to vector<8x128xf32>
    %36 = arith.select %33, %34, %35 : vector<8x128xi1>, vector<8x128xf32>
    %37 = arith.select %25, %31, %36 : vector<8x128xi1>, vector<8x128xf32>
    %38 = tpu.iota {dimensions = array<i32: 1>} : vector<8x128xi32>
    %c1_i32_13 = arith.constant 1 : i32
    %39 = vector.broadcast %c1_i32_13 : i32 to vector<8x128xi32>
    %40 = arith.andi %38, %39 : vector<8x128xi32>
    %c1_i32_14 = arith.constant 1 : i32
    %41 = vector.broadcast %c1_i32_14 : i32 to vector<8x128xi32>
    %42 = arith.cmpi eq, %40, %41 : vector<8x128xi32>
    %cst_15 = arith.constant 1.000000e+00 : f32
    %43 = vector.broadcast %cst_15 : f32 to vector<8x128xf32>
    %44 = arith.subf %43, %37 : vector<8x128xf32>
    %cst_16 = arith.constant 0.000000e+00 : f32
    %45 = vector.broadcast %cst_16 : f32 to vector<8x128xf32>
    %46 = arith.select %42, %44, %45 : vector<8x128xi1>, vector<8x128xf32>
    %c0_17 = arith.constant 0 : index
    %c0_18 = arith.constant 0 : index
    %47 = vector.load %arg4[%c0_17, %c0_18] : memref<1x128xf32, #tpu.memory_space<vmem>>, vector<1x128xf32>
    %cst_19 = arith.constant dense<0.000000e+00> : vector<128xf32>
    %48 = vector.multi_reduction <add>, %46, %cst_19 [0] : vector<8x128xf32> to vector<128xf32>
    %49 = vector.shape_cast %48 : vector<128xf32> to vector<1x128xf32>
    %50 = arith.addf %47, %49 : vector<1x128xf32>
    %c0_20 = arith.constant 0 : index
    %c0_21 = arith.constant 0 : index
    %51 = vector.load %arg4[%c0_20, %c0_21] : memref<1x128xf32, #tpu.memory_space<vmem>>, vector<1x128xf32>
    tpu.vector_store %arg4[%c0_20, %c0_21], %50 {strides = array<i32>} : memref<1x128xf32, #tpu.memory_space<vmem>>, vector<1x128xf32>,
    %c0_i32_22 = arith.constant 0 : i32
    %52 = arith.cmpi eq, %arg0, %c0_i32_22 : i32
    %53 = arith.extui %52 : i1 to i32
    %c0_i32_23 = arith.constant 0 : i32
    %54 = arith.cmpi ne, %53, %c0_i32_23 : i32
    scf.if %54 {
      %c0_24 = arith.constant 0 : index
      %c0_25 = arith.constant 0 : index
      %55 = vector.load %arg4[%c0_24, %c0_25] : memref<1x128xf32, #tpu.memory_space<vmem>>, vector<1x128xf32>
      %56 = vector.shape_cast %55 : vector<1x128xf32> to vector<1x1x128xf32>
      %cst_26 = arith.constant dense<0.000000e+00> : vector<1xf32>
      %57 = vector.multi_reduction <add>, %56, %cst_26 [1, 2] : vector<1x1x128xf32> to vector<1xf32>
      %58 = vector.shape_cast %57 : vector<1xf32> to vector<1x1x1xf32>
      %59 = vector.extract %58[0, 0, 0] : f32 from vector<1x1x1xf32>
      %cst_27 = arith.constant 1.250000e-01 : f32
      %60 = arith.mulf %59, %cst_27 : f32
      %c0_28 = arith.constant 0 : index
      %c0_29 = arith.constant 0 : index
      %61 = memref.load %arg3[%c0_28, %c0_29] : memref<1x1xf32, #tpu.memory_space<smem>>
      memref.store %60, %arg3[%c0_28, %c0_29] : memref<1x1xf32, #tpu.memory_space<smem>>
    } else {
    }
    return
  }
  func.func @transform_0(%arg0: i32) -> (i32, i32) {
    %c0_i32 = arith.constant 0 : i32
    %c0_i32_0 = arith.constant 0 : i32
    return %arg0, %c0_i32 : i32, i32
  }
  func.func @transform_1(%arg0: i32) -> (i32, i32) {
    %c0_i32 = arith.constant 0 : i32
    %c0_i32_0 = arith.constant 0 : i32
    return %arg0, %c0_i32 : i32, i32
  }
  func.func @transform_2(%arg0: i32) -> (i32, i32) {
    %c0_i32 = arith.constant 0 : i32
    %c0_i32_0 = arith.constant 0 : i32
    %c0_i32_1 = arith.constant 0 : i32
    return %c0_i32, %c0_i32_0 : i32, i32
  }
}

</mosaic_0001>

<llo_original>
// kernel: angular_loss.1
$region0: #{angular_loss.1}
  #allocation0 [shape = 'u32[]', space=smem, size = 0x4, offset = 0x4, fixed_abs, tag = 'smem constant byte address 0x4 - core index']
  #allocation1 [shape = 'u32[72,128]{1,0:T(1,128)}', space=vmem, size = 0x9000, scoped, tag = 'internal scratch']
  #allocation2 [shape = 'f32[1,128]{1,0:T(1,128)}', space=vmem, size = 0x200, scoped, tag = 'scratch operand']
  %s0 = inlined_call_operand.vmem [shape: f32[8,128], index: 0, kind: input, shape index: {}]
  %s1 = inlined_call_operand.vmem [shape: f32[8,128], index: 1, kind: input, shape index: {}]
  %s2 = inlined_call_operand.hbm [shape: f32[1,1], index: 2, kind: output, shape index: {}]
  %s3 = sld [smem:[#allocation0]]
  $region26: #{angular_loss.1} parent=0
    _
  %s5 = ssub.s32 1, %s3
  %s6 = scalar_select 0, %s5, %s3
  $region1: #{angular_loss.1} parent=0
    #allocation3 [shape = 'u8[512]{0}', space=smem, size = 0x200, scoped, tag = 'output window, operand 0, single buffered']
    #allocation4 [shape = 's32[1]{0}', space=sflag, size = 0x4, scoped, tag = 'scoped memory for angular_loss.1']
    %7 = vsyncpa [#allocation4], 0
    // Predicated region
    $region2: #{angular_loss.1} parent=1 // pred_check
      _
    $region3: #{angular_loss.1} parent=1 // pred_check_branch
      %9 = sbr.rel (0) target = $region5
    $region4: #{angular_loss.1} parent=1 // pred_region
      _
    $region5: #{angular_loss.1} parent=1 // pred_fallthru
      _
    // Predicated region
    $region6: #{angular_loss.1} parent=1 // pred_check
      _
    $region7: #{angular_loss.1} parent=1 // pred_check_branch
      %11 = sbr.rel (0) target = $region9
    $region8: #{angular_loss.1} parent=1 // pred_region
      _
    $region9: #{angular_loss.1} parent=1 // pred_fallthru
      _
    %p12 = scmp.eq.s32.totalorder 0, 0
    // Predicated region
    $region10: #{angular_loss.1} parent=1 // pred_check
      %p13 = pneg %p12
    $region11: #{angular_loss.1} parent=1 // pred_check_branch
      %15 = sbr.rel (%p13) target = $region13
    $region12: #{angular_loss.1} parent=1 // pred_region
      %16 = vst [vmem:[#allocation2] sm:$0x1] 0.0
    $region13: #{angular_loss.1} parent=1 // pred_fallthru
      _
    %v17 = vld [vmem:[%s0] sm:$0xff]
    %v18 = vld [vmem:[%s1] sm:$0xff]
    %v19 = vmul.f32 %v17, %v18
    %v20 = vmul.f32 %v17, %v17
    %v21 = vmul.f32 %v18, %v18
    %22 = vrot.lane.b32.xlu0 %v19, 1
    %v23 = vpop.permute.xlu0 %22
    %v24 = vadd.f32 %v19, %v23
    %25 = vrot.lane.b32.xlu0 %v20, 1
    %v26 = vpop.permute.xlu0 %25
    %v27 = vadd.f32 %v20, %v26
    %28 = vrot.lane.b32.xlu0 %v21, 1
    %v29 = vpop.permute.xlu0 %28
    %v30 = vadd.f32 %v21, %v29
    %vm31 = vcmp.gt.f32.partialorder %v27, 0.0
    %v32 = vsel %vm31, %v27, 1.0
    %v33 = vrsqrt.pop %v32
    %v34 = vmul.f32 %v33, %v32
    %v35 = vmul.f32 %v34, %v33
    %v36 = vmul.f32 0.5, %v35
    %v37 = vsub.f32 1.5, %v36
    %v38 = vmul.f32 %v33, %v37
    %vm39 = vweird.f32 %v32
    %vm40 = vweird.f32 %v33
    %vm41 = vmor %vm39, %vm40
    %v42 = vsel %vm41, %v33, %v38
    %vm43 = vcmp.gt.f32.partialorder %v30, 0.0
    %v44 = vsel %vm43, %v30, 1.0
    %v45 = vrsqrt.pop %v44
    %v46 = vmul.f32 %v45, %v44
    %v47 = vmul.f32 %v46, %v45
    %v48 = vmul.f32 0.5, %v47
    %v49 = vsub.f32 1.5, %v48
    %v50 = vmul.f32 %v45, %v49
    %vm51 = vweird.f32 %v44
    %vm52 = vweird.f32 %v45
    %vm53 = vmor %vm51, %vm52
    %v54 = vsel %vm53, %v45, %v50
    %v55 = vmul.f32 %v24, %v42
    %v56 = vmul.f32 %v55, %v54
    %v57 = vmul.f32 %v17, %v42
    %v58 = vsel %vm43, %v56, %v57
    %v59 = vmul.f32 %v18, %v54
    %v60 = vsel %vm43, %v59, 1.0
    %v61 = vsel %vm31, %v58, %v60
    %v62 = vlaneseq
    %v63 = vand.u32 %v62, 127
    %v64 = vand.u32 %v63, 1
    %vm65 = vcmp.eq.s32.totalorder %v64, 1
    %v66 = vsub.f32 1.0, %v61
    %v67 = vsel %vm65, %v66, 0.0
    %v68 = vld [vmem:[#allocation2] sm:$0x1]
    %v69 = vrot.slane %v67, 4
    %v70 = vadd.f32 %v67, %v69
    %v71 = vrot.slane %v70, 2
    %v72 = vadd.f32 %v70, %v71
    %v73 = vrot.slane %v72, 1
    %v74 = vadd.f32 %v72, %v73
    %v75 = vadd.f32 %v68, %v74
    %76 = vst [vmem:[#allocation2] sm:$0x1] %v75
    // Predicated region
    $region14: #{angular_loss.1} parent=1 // pred_check
      %p77 = pneg %p12
    $region15: #{angular_loss.1} parent=1 // pred_check_branch
      %79 = sbr.rel (%p77) target = $region17
    $region16: #{angular_loss.1} parent=1 // pred_region
      %v80 = vld [vmem:[#allocation2] sm:$0x1]
      %vm81 = vcmask 1040384
      %v82 = vsel %vm81, %v80, 0.0
      %83 = vadd.xlane.f32.xlu0 %v82
      %v84 = vpop.xlane.xlu0 %83
      %v85 = vrot.slane %v84, 4
      %v86 = vadd.f32 %v84, %v85
      %v87 = vrot.slane %v86, 2
      %v88 = vadd.f32 %v86, %v87
      %v89 = vrot.slane %v88, 1
      %v90 = vadd.f32 %v88, %v89
      %s91 = vtos %v90
      %s92 = smul.f32 %s91, 0.125
      %s93 = scalar_lea.smem [#allocation3], 0
      %94 = sst [smem:[%s93]] %s92
    $region17: #{angular_loss.1} parent=1 // pred_fallthru
      _
    // Predicated region
    $region18: #{angular_loss.1} parent=1 // pred_check
      _
    $region19: #{angular_loss.1} parent=1 // pred_check_branch
      %96 = sbr.rel (0) target = $region21
    $region20: #{angular_loss.1} parent=1 // pred_region
      %98 = vsyncadd [#allocation4], 0
      %s100 = sshll.u32 %s2, 4
      %s101 = int_to_ptr.hbm [resolvable:$true] %s100
      %103 = dma.smem_to_hbm [#allocation3], 16, %s101, [#allocation4]
    $region21: #{angular_loss.1} parent=1 // pred_fallthru
      _
    // Predicated region
    $region22: #{angular_loss.1} parent=1 // pred_check
      _
    $region23: #{angular_loss.1} parent=1 // pred_check_branch
      %105 = sbr.rel (0) target = $region25
    $region24: #{angular_loss.1} parent=1 // pred_region
      %107 = dma.done [#allocation4], 16
    $region25: #{angular_loss.1} parent=1 // pred_fallthru
      _
    %108 = sfence
    %109 = vsyncpa [#allocation4], 1

</llo_original>
